<compile_context>
chip_gen: v5e
topology: v5e:2x2
jax: 0.10.0
libtpu: 0.0.40
codegen_flags: <defaults>
</compile_context>

<pallas_src>
import functools

import jax
import jax.numpy as jnp
from jax import lax
from jax.experimental import pallas as pl
from jax.experimental.pallas import tpu as pltpu


# -----------------------------------------------------------------------------
# tile helper: largest tile <= pref that is a multiple of `align` and divides
# `dim`; falls back to the full dim (always legal for TPU block shapes).
# -----------------------------------------------------------------------------
def _pick_tile(dim, pref, align):
    if dim <= pref:
        return dim
    t = (pref // align) * align
    while t >= align:
        if dim % t == 0:
            return t
        t -= align
    return dim


# -----------------------------------------------------------------------------
# Kernel 1: tiled GPT-2 Conv1D  (y = x @ W + b), accumulate over K grid axis
# -----------------------------------------------------------------------------
def _matmul_bias_kernel(x_ref, w_ref, b_ref, o_ref, acc_ref):
    # x_ref: (1, tm, tk), w_ref: (tk, tn), b_ref: (1, tn), o_ref: (1, tm, tn)
    @pl.when(pl.program_id(3) == 0)
    def _():
        acc_ref[...] = jnp.zeros_like(acc_ref)

    # bf16 MXU operands, f32 accumulation (v6e/v7x MXU are bf16-native).
    acc_ref[...] += jnp.dot(
        x_ref[0].astype(jnp.bfloat16),
        w_ref[...].astype(jnp.bfloat16),
        preferred_element_type=jnp.float32,
    )

    @pl.when(pl.program_id(3) == pl.num_programs(3) - 1)
    def _():
        o_ref[0] = acc_ref[...] + b_ref[...]


def conv1d(x, w, b, *, tm_pref=256, tn_pref=256, tk_pref=512):
    """GPT-2 Conv1D: x (B,S,IN) @ w (IN,OUT) + b (OUT,) -> (B,S,OUT).

    Tiled grid (B, S/tm, OUT/tn, IN/tk), reduction axis last, f32 accumulator
    in VMEM scratch.  Tile prefs sized for ~64 MiB VMEM (v7x); on v5e prefer
    tm=tn=128, tk=256 (4x128^2 MXU) — prefs only matter once dims exceed them.
    """
    B, S, IN = x.shape
    OUT = w.shape[1]
    tm = _pick_tile(S, tm_pref, 8)
    tn = _pick_tile(OUT, tn_pref, 128)
    tk = _pick_tile(IN, tk_pref, 128)
    grid = (B, S // tm, OUT // tn, IN // tk)

    cost = pl.CostEstimate(
        flops=2 * B * S * IN * OUT,
        transcendentals=0,
        bytes_accessed=4 * (B * S * IN + IN * OUT + OUT + B * S * OUT),
    )
    return pl.pallas_call(
        _matmul_bias_kernel,
        out_shape=jax.ShapeDtypeStruct((B, S, OUT), jnp.float32),
        grid=grid,
        in_specs=[
            pl.BlockSpec((1, tm, tk), lambda bi, m, n, k: (bi, m, k)),
            pl.BlockSpec((tk, tn), lambda bi, m, n, k: (k, n)),
            pl.BlockSpec((1, tn), lambda bi, m, n, k: (0, n)),
        ],
        out_specs=pl.BlockSpec((1, tm, tn), lambda bi, m, n, k: (bi, m, n)),
        scratch_shapes=[pltpu.VMEM((tm, tn), jnp.float32)],
        compiler_params=pltpu.CompilerParams(
            dimension_semantics=("parallel", "parallel", "parallel", "arbitrary")
        ),
        cost_estimate=cost,
    )(x, w, b.reshape(1, OUT))


# -----------------------------------------------------------------------------
# Kernel 2: fused (optional LMF) + multi-head attention, one batch per step
# -----------------------------------------------------------------------------
def _attn_kernel(*refs, num_heads, head_dim, scale, causal, masked_bias,
                 fuse_latent):
    if fuse_latent:
        qkv_ref, lat_ref, wt_ref, bt_ref, wl_ref, bl_ref, o_ref = refs
    else:
        qkv_ref, o_ref = refs

    qkv = qkv_ref[0]                       # (S, 3E) f32
    S, E3 = qkv.shape
    E = E3 // 3
    v_full = qkv[:, 2 * E:]                # value slice, (S, E)

    if fuse_latent:
        # LMF, rank already summed out and the ones-column folded into biases:
        #   text   = v @ sum_r Wt[r][:E]   + (sum_r bt[r] + sum_r Wt[r][E])
        #   latent = lat @ sum_r Wl[r][:L] + (sum_r bl[r] + sum_r Wl[r][L])
        lat = lat_ref[0]                   # (1, L)
        text = jnp.dot(
            v_full.astype(jnp.bfloat16), wt_ref[...].astype(jnp.bfloat16),
            preferred_element_type=jnp.float32) + bt_ref[...]
        latf = jnp.dot(
            lat.astype(jnp.bfloat16), wl_ref[...].astype(jnp.bfloat16),
            preferred_element_type=jnp.float32) + bl_ref[...]
        v_full = text * latf               # (S, E), broadcast over seq

    if causal:
        row = lax.broadcasted_iota(jnp.int32, (S, S), 0)
        col = lax.broadcasted_iota(jnp.int32, (S, S), 1)
        keep = col <= row

    outs = []
    for h in range(num_heads):             # static unroll, heads stay in-VMEM
        lo = h * head_dim
        q = qkv[:, lo:lo + head_dim] * scale        # fold 1/sqrt(D) into q
        k = qkv[:, E + lo:E + lo + head_dim]
        v = v_full[:, lo:lo + head_dim]
        # QK^T via dot_general contracting dims — no explicit K transpose.
        s = lax.dot_general(
            q.astype(jnp.bfloat16), k.astype(jnp.bfloat16),
            (((1,), (1,)), ((), ())),
            preferred_element_type=jnp.float32)     # (S, S) f32
        if causal:
            s = jnp.where(keep, s, jnp.float32(masked_bias))
        # softmax in f32 on the VPU; divide replaced by EUP reciprocal.
        s = s - jnp.max(s, axis=-1, keepdims=True)
        p = jnp.exp(s)
        p = p * pl.reciprocal(jnp.sum(p, axis=-1, keepdims=True), approx=True)
        outs.append(jnp.dot(
            p.astype(jnp.bfloat16), v.astype(jnp.bfloat16),
            preferred_element_type=jnp.float32))
    # single lane-dense (S, E) store, already in merged-head layout
    o_ref[0] = jnp.concatenate(outs, axis=-1)


def attention(qkv, *, num_heads, scale, causal,
              latent=None, wt=None, bt=None, wl=None, bl=None):
    """qkv: (B, S, 3E) -> merged-head attention output (B, S, E)."""
    B, S, E3 = qkv.shape
    E = E3 // 3
    D = E // num_heads
    fuse = latent is not None

    kern = functools.partial(
        _attn_kernel, num_heads=num_heads, head_dim=D, scale=scale,
        causal=causal, masked_bias=-10000.0, fuse_latent=fuse)

    in_specs = [pl.BlockSpec((1, S, E3), lambda bi: (bi, 0, 0))]
    args = [qkv]
    flops = 4 * B * S * S * E
    if fuse:
        L = latent.shape[-1]
        in_specs += [
            pl.BlockSpec((1, 1, L), lambda bi: (bi, 0, 0)),
            pl.BlockSpec((E, E), lambda bi: (0, 0)),
            pl.BlockSpec((1, E), lambda bi: (0, 0)),
            pl.BlockSpec((L, E), lambda bi: (0, 0)),
            pl.BlockSpec((1, E), lambda bi: (0, 0)),
        ]
        args += [latent, wt, bt, wl, bl]
        flops += 2 * B * S * E * E + 2 * B * L * E

    cost = pl.CostEstimate(
        flops=flops,
        transcendentals=B * num_heads * S * S,
        bytes_accessed=4 * (B * S * E3 + B * S * E),
    )
    # TODO(synk): for S >~ 512 switch to a flash-style tiled kernel (query +
    #             KV grid axes, running max/denominator scratch, causal tile
    #             skipping) instead of full S x S scores per batch.
    return pl.pallas_call(
        kern,
        out_shape=jax.ShapeDtypeStruct((B, S, E), jnp.float32),
        grid=(B,),
        in_specs=in_specs,
        out_specs=pl.BlockSpec((1, S, E), lambda bi: (bi, 0, 0)),
        compiler_params=pltpu.CompilerParams(dimension_semantics=("parallel",)),
        cost_estimate=cost,
    )(*args)


# -----------------------------------------------------------------------------
# GPT2Attention.forward (latent optional, use_causal_mask optional)
# -----------------------------------------------------------------------------
def gpt2_attention_forward(params, hidden_states, latent=None,
                           use_causal_mask=False):
    B, S, E = hidden_states.shape
    H = params["num_heads"]
    D = E // H

    # c_attn: (B, S, E) -> (B, S, 3E); q/k/v are consumed directly from this
    # layout inside the attention kernel (no split / transpose glue).
    qkv = conv1d(hidden_states, params["c_attn_w"], params["c_attn_b"])

    scale = 1.0 / float(D) ** 0.5 if params["scale_attn_weights"] else 1.0

    if latent is not None:
        L = latent.shape[1]
        # Fold the LMF rank loop and the ones-column into single weights/biases
        # (tiny one-time glue; mathematically identical to the module).
        wt_sum = params["lmf_wt"].sum(0)                       # (E+1, E)
        wl_sum = params["lmf_wl"].sum(0)                       # (L+1, E)
        wt_main = wt_sum[:-1]                                  # (E, E)
        wl_main = wl_sum[:-1]                                  # (L, E)
        bt_tot = (params["lmf_bt"].sum(axis=(0, 1)) + wt_sum[-1]).reshape(1, E)
        bl_tot = (params["lmf_bl"].sum(axis=(0, 1)) + wl_sum[-1]).reshape(1, E)
        lat3 = latent.reshape(B, 1, L)
        attn_out = attention(qkv, num_heads=H, scale=scale,
                             causal=use_causal_mask, latent=lat3,
                             wt=wt_main, bt=bt_tot, wl=wl_main, bl=bl_tot)
    else:
        attn_out = attention(qkv, num_heads=H, scale=scale,
                             causal=use_causal_mask)

    out = conv1d(attn_out, params["c_proj_w"], params["c_proj_b"])
    # resid_dropout / attn_dropout: identity in eval mode.
    # TODO(synk): layer_past / use_cache / output_attentions paths not
    #             exercised (module defaults: None / False / False).
    return out


# -----------------------------------------------------------------------------
# Pure-JAX reference (sanity check)
# -----------------------------------------------------------------------------
def reference_forward(params, hidden_states, latent=None, use_causal_mask=False):
    B, S, E = hidden_states.shape
    H = params["num_heads"]
    D = E // H
    qkv = hidden_states @ params["c_attn_w"] + params["c_attn_b"]
    q, k, v = jnp.split(qkv, 3, axis=2)
    if latent is not None:
        v_cat = jnp.concatenate([v, jnp.ones((B, S, 1), v.dtype)], axis=-1)
        lat_cat = jnp.concatenate([latent, jnp.ones((B, 1), latent.dtype)], axis=-1)
        text_sum = jnp.einsum("bsi,rio->bso", v_cat, params["lmf_wt"]) \
            + params["lmf_bt"].sum(0)
        lat_sum = jnp.einsum("bi,rio->bo", lat_cat, params["lmf_wl"]) \
            + params["lmf_bl"].sum(0)[0]
        v = text_sum * lat_sum[:, None, :]
    qh = q.reshape(B, S, H, D).transpose(0, 2, 1, 3)
    kh = k.reshape(B, S, H, D).transpose(0, 2, 1, 3)
    vh = v.reshape(B, S, H, D).transpose(0, 2, 1, 3)
    s = jnp.einsum("bhqd,bhkd->bhqk", qh, kh)
    if params["scale_attn_weights"]:
        s = s / float(D) ** 0.5
    if use_causal_mask:
        mask = jnp.tril(jnp.ones((S, S), bool))
        s = jnp.where(mask[None, None], s, jnp.float32(-10000.0))
    p = jax.nn.softmax(s, axis=-1)
    o = jnp.einsum("bhqk,bhkd->bhqd", p, vh)
    merged = o.transpose(0, 2, 1, 3).reshape(B, S, E)
    return merged @ params["c_proj_w"] + params["c_proj_b"]


# -----------------------------------------------------------------------------
# main
# -----------------------------------------------------------------------------
if __name__ == "__main__":
    # small config consistent with the module
    B, S, E = 2, 8, 32          # batch, seq, hidden_size
    H = 4                       # num_attention_heads
    L = 16                      # latent_size
    RANK = 2                    # latent_lmf_rank

    key = jax.random.PRNGKey(0)
    ks = jax.random.split(key, 12)
    init = lambda k, shape: (0.02 * jax.random.normal(k, shape)).astype(jnp.float32)

    params = {
        "num_heads": H,
        "scale_attn_weights": True,
        "c_attn_w": init(ks[0], (E, 3 * E)),
        "c_attn_b": init(ks[1], (3 * E,)),
        "c_proj_w": init(ks[2], (E, E)),
        "c_proj_b": init(ks[3], (E,)),
        # LMF: rank Linear layers stored as (in, out) matrices, stacked on rank
        "lmf_wt": init(ks[4], (RANK, E + 1, E)),
        "lmf_bt": init(ks[5], (RANK, 1, E)),
        "lmf_wl": init(ks[6], (RANK, L + 1, E)),
        "lmf_bl": init(ks[7], (RANK, 1, E)),
    }

    hidden_states = jax.random.normal(ks[8], (B, S, E), dtype=jnp.float32)
    latent = jax.random.normal(ks[9], (B, L), dtype=jnp.float32)

    # default path: latent=None, use_causal_mask=False
    out_default = gpt2_attention_forward(params, hidden_states)
    out_default = jax.block_until_ready(out_default)

    # full path: latent fusion + causal masking
    out_full = gpt2_attention_forward(params, hidden_states, latent=latent,
                                      use_causal_mask=True)
    out_full = jax.block_until_ready(out_full)

    # sanity check against pure-JAX f32 reference (kernels use bf16 MXU
    # operands with f32 accumulation, so allow a small tolerance)
    ref_default = reference_forward(params, hidden_states)
    ref_full = reference_forward(params, hidden_states, latent=latent,
                                 use_causal_mask=True)
    assert out_default.shape == (B, S, E)
    assert out_full.shape == (B, S, E)
    assert jnp.allclose(out_default, ref_default, atol=5e-3, rtol=5e-3)
    assert jnp.allclose(out_full, ref_full, atol=5e-3, rtol=5e-3)

    print("KERNEL_OK")
</pallas_src>

<mosaic_0001>
module attributes {stable_mosaic.version = 11 : i64} {
  func.func @_matmul_bias_kernel(%arg0: i32, %arg1: i32, %arg2: i32, %arg3: i32, %arg4: memref<1x8x32xf32, #tpu.memory_space<vmem>>, %arg5: memref<32x96xf32, #tpu.memory_space<vmem>>, %arg6: memref<1x96xf32, #tpu.memory_space<vmem>>, %arg7: memref<1x8x96xf32, #tpu.memory_space<vmem>>, %arg8: memref<8x96xf32, #tpu.memory_space<vmem>>) attributes {dimension_semantics = [#tpu.dimension_semantics<parallel>, #tpu.dimension_semantics<parallel>, #tpu.dimension_semantics<parallel>, #tpu.dimension_semantics<arbitrary>], iteration_bounds = array<i64: 2, 1, 1, 1>, scalar_prefetch = 0 : i64, scratch_operands = 1 : i64, tpu.core_type = #tpu.core_type<tc>, window_params = [{transform_indices = @transform_0, window_bounds = array<i64: 1, 8, 32>}, {transform_indices = @transform_1, window_bounds = array<i64: 32, 96>}, {transform_indices = @transform_2, window_bounds = array<i64: 1, 96>}, {transform_indices = @transform_3, window_bounds = array<i64: 1, 8, 96>}]} {
    %c0_i32 = arith.constant 0 : i32
    %0 = arith.cmpi eq, %arg3, %c0_i32 : i32
    %1 = arith.extui %0 : i1 to i32
    %c0_i32_0 = arith.constant 0 : i32
    %2 = arith.cmpi ne, %1, %c0_i32_0 : i32
    scf.if %2 {
      %cst_11 = arith.constant 0.000000e+00 : f32
      %15 = vector.broadcast %cst_11 : f32 to vector<8x96xf32>
      %c0_12 = arith.constant 0 : index
      %c0_13 = arith.constant 0 : index
      %16 = vector.load %arg8[%c0_12, %c0_13] : memref<8x96xf32, #tpu.memory_space<vmem>>, vector<8x96xf32>
      tpu.vector_store %arg8[%c0_12, %c0_13], %15 {strides = array<i32>} : memref<8x96xf32, #tpu.memory_space<vmem>>, vector<8x96xf32>,
    } else {
    }
    %c0 = arith.constant 0 : index
    %c0_1 = arith.constant 0 : index
    %3 = vector.load %arg8[%c0, %c0_1] : memref<8x96xf32, #tpu.memory_space<vmem>>, vector<8x96xf32>
    %c0_2 = arith.constant 0 : index
    %c0_3 = arith.constant 0 : index
    %c0_4 = arith.constant 0 : index
    %4 = vector.load %arg4[%c0_2, %c0_3, %c0_4] : memref<1x8x32xf32, #tpu.memory_space<vmem>>, vector<1x8x32xf32>
    %5 = vector.shape_cast %4 : vector<1x8x32xf32> to vector<8x32xf32>
    %6 = arith.truncf %5 : vector<8x32xf32> to vector<8x32xbf16>
    %c0_5 = arith.constant 0 : index
    %c0_6 = arith.constant 0 : index
    %7 = vector.load %arg5[%c0_5, %c0_6] : memref<32x96xf32, #tpu.memory_space<vmem>>, vector<32x96xf32>
    %8 = arith.truncf %7 : vector<32x96xf32> to vector<32x96xbf16>
    %cst = arith.constant dense<0.000000e+00> : vector<8x96xf32>
    %9 = tpu.matmul %6, %8, %cst {dimension_numbers = #tpu.dot_dimension_numbers<[1], [0], [0], [1], [0, 0, 1, 1], [], []>} : vector<8x32xbf16>, vector<32x96xbf16>, vector<8x96xf32> -> vector<8x96xf32>
    %10 = arith.addf %3, %9 : vector<8x96xf32>
    %c0_7 = arith.constant 0 : index
    %c0_8 = arith.constant 0 : index
    %11 = vector.load %arg8[%c0_7, %c0_8] : memref<8x96xf32, #tpu.memory_space<vmem>>, vector<8x96xf32>
    tpu.vector_store %arg8[%c0_7, %c0_8], %10 {strides = array<i32>} : memref<8x96xf32, #tpu.memory_space<vmem>>, vector<8x96xf32>,
    %c0_i32_9 = arith.constant 0 : i32
    %12 = arith.cmpi eq, %arg3, %c0_i32_9 : i32
    %13 = arith.extui %12 : i1 to i32
    %c0_i32_10 = arith.constant 0 : i32
    %14 = arith.cmpi ne, %13, %c0_i32_10 : i32
    scf.if %14 {
      %c0_11 = arith.constant 0 : index
      %c0_12 = arith.constant 0 : index
      %15 = vector.load %arg8[%c0_11, %c0_12] : memref<8x96xf32, #tpu.memory_space<vmem>>, vector<8x96xf32>
      %c0_13 = arith.constant 0 : index
      %c0_14 = arith.constant 0 : index
      %16 = vector.load %arg6[%c0_13, %c0_14] : memref<1x96xf32, #tpu.memory_space<vmem>>, vector<1x96xf32>
      %17 = vector.broadcast %16 : vector<1x96xf32> to vector<8x96xf32>
      %18 = arith.addf %15, %17 : vector<8x96xf32>
      %c0_15 = arith.constant 0 : index
      %c0_16 = arith.constant 0 : index
      %c0_17 = arith.constant 0 : index
      %19 = vector.load %arg7[%c0_15, %c0_16, %c0_17] : memref<1x8x96xf32, #tpu.memory_space<vmem>>, vector<1x8x96xf32>
      %20 = vector.shape_cast %19 : vector<1x8x96xf32> to vector<8x96xf32>
      %21 = vector.shape_cast %18 : vector<8x96xf32> to vector<1x8x96xf32>
      tpu.vector_store %arg7[%c0_15, %c0_16, %c0_17], %21 {strides = array<i32>} : memref<1x8x96xf32, #tpu.memory_space<vmem>>, vector<1x8x96xf32>,
    } else {
    }
    return
  }
  func.func @transform_0(%arg0: i32, %arg1: i32, %arg2: i32, %arg3: i32) -> (i32, i32, i32) {
    %c0_i32 = arith.constant 0 : i32
    return %arg0, %arg1, %arg3 : i32, i32, i32
  }
  func.func @transform_1(%arg0: i32, %arg1: i32, %arg2: i32, %arg3: i32) -> (i32, i32) {
    %c0_i32 = arith.constant 0 : i32
    return %arg3, %arg2 : i32, i32
  }
  func.func @transform_2(%arg0: i32, %arg1: i32, %arg2: i32, %arg3: i32) -> (i32, i32) {
    %c0_i32 = arith.constant 0 : i32
    %c0_i32_0 = arith.constant 0 : i32
    return %c0_i32, %arg2 : i32, i32
  }
  func.func @transform_3(%arg0: i32, %arg1: i32, %arg2: i32, %arg3: i32) -> (i32, i32, i32) {
    %c0_i32 = arith.constant 0 : i32
    return %arg0, %arg1, %arg2 : i32, i32, i32
  }
}

</mosaic_0001>

<llo_original>
// kernel: tpu_custom_call.1
$region0: #{tpu_custom_call.1}
  #allocation0 [shape = 'u32[]', space=smem, size = 0x4, offset = 0x4, fixed_abs, tag = 'smem constant byte address 0x4 - core index']
  #allocation1 [shape = 'u32[72,128]{1,0:T(1,128)}', space=vmem, size = 0x9000, scoped, tag = 'internal scratch']
  #allocation2 [shape = 'f32[8,96]{1,0:T(8,128)}', space=vmem, size = 0x1000, scoped, tag = 'scratch operand']
  %s0 = inlined_call_operand.hbm [shape: f32[2,8,32], index: 0, kind: input, shape index: {}]
  %s1 = inlined_call_operand.hbm [shape: f32[32,96], index: 1, kind: input, shape index: {}]
  %s2 = inlined_call_operand.vmem [shape: f32[1,96], index: 2, kind: input, shape index: {}]
  %s3 = inlined_call_operand.hbm [shape: f32[2,8,96], index: 3, kind: output, shape index: {}]
  %s4 = sld [smem:[#allocation0]]
  $region61: #{tpu_custom_call.1} parent=0
    _
  %s6 = ssub.s32 1, %s4
  %s7 = scalar_select 0, %s6, %s4
  $region1: #{tpu_custom_call.1} parent=0
    #allocation3 [shape = 'u8[8192]{0}', space=vmem, size = 0x2000, scoped, tag = 'input window, operand 0']
    #allocation4 [shape = 's32[2]{0}', space=sflag, size = 0x8, scoped, tag = 'scoped memory for tpu_custom_call.1']
    #allocation5 [shape = 's32[2]{0}', space=sflag, size = 0x8, scoped, tag = 'scoped memory for tpu_custom_call.1']
    #allocation6 [shape = 'u8[16384]{0}', space=vmem, size = 0x4000, scoped, tag = 'input window, operand 1, single buffered']
    #allocation7 [shape = 's32[1]{0}', space=sflag, size = 0x4, scoped, tag = 'scoped memory for tpu_custom_call.1']
    #allocation8 [shape = 'u8[8192]{0}', space=vmem, size = 0x2000, scoped, tag = 'output window, operand 0']
    %8 = vsyncpa [#allocation4], 0
    %s9 = scalar_lea.sflag [#allocation4], 1
    %10 = vsyncpa %s9, 0
    %11 = vsyncpa [#allocation7], 0
    %12 = vsyncpa [#allocation5], 0
    %s13 = scalar_lea.sflag [#allocation5], 1
    %14 = vsyncpa %s13, 0
    loop: start=0, step=1, limit=4
    $region2: #{tpu_custom_call.1} parent=1 // loop_pre_header
      _
    $region3: #{tpu_custom_call.1} parent=1 // loop_header
      %s16 = sphi 0, %s20
      %p17 = scmp.ge.s32.totalorder %s16, 4
      %s23 = sphi 0, %s49
      %s24 = sphi 0, %s45
      %s25 = sphi 0, %s41
      %s26 = sphi 0, %s37
      %s27 = sphi 0, %s23
      %s28 = sphi 0, %s24
      %s29 = sphi 0, %s25
      %s30 = sphi 0, %s26
      %s31 = sphi 0, %s27
      %s32 = sphi 0, %s28
      %s33 = sphi 0, %s29
      %s34 = sphi 0, %s30
      %s56 = sphi 0, %s58
      %s59 = sphi 0, %s56
      %s60 = sphi 0, %s59
      %s76 = sphi 0, %s60
      %s84 = sphi 0, %s86
      %s87 = sphi 0, %s84
      %s88 = sphi 0, %s87
      %s104 = sphi 0, %s88
      %s110 = sphi 0, %s112
      %s113 = sphi 0, %s110
      %s114 = sphi 0, %s113
      %s130 = sphi 0, %s114
      %s140 = sphi 0, %s142
      %s143 = sphi 0, %s140
      %s144 = sphi 0, %s143
      %s160 = sphi 0, %s144
    $region4: #{tpu_custom_call.1} parent=1 // loop_header_branch
      %19 = sbr.rel (%p17) target = $region8
    $region5: #{tpu_custom_call.1} parent=1 // loop_body
      %s21 = ssub.s32 %s16, 1
      %s22 = ssub.s32 %s16, 2
      %s35 = sadd.s32 1, %s26
      %p36 = scmp.ge.s32.totalorder %s35, 1
      %s37 = scalar_select %p36, 0, %s35
      %s38 = sadd.s32 1, %s25
      %s39 = scalar_select %p36, %s38, %s25
      %p40 = scmp.ge.s32.totalorder %s39, 1
      %s41 = scalar_select %p40, 0, %s39
      %s42 = sadd.s32 1, %s24
      %s43 = scalar_select %p40, %s42, %s24
      %p44 = scmp.ge.s32.totalorder %s43, 1
      %s45 = scalar_select %p44, 0, %s43
      %s46 = sadd.s32 1, %s23
      %s47 = scalar_select %p44, %s46, %s23
      %p48 = scmp.ge.s32.totalorder %s47, 2
      %s49 = scalar_select %p48, 0, %s47
      %s50 = ssub.s32 %s23, %s49
      %s51 = ssub.s32 %s24, %s45
      %s52 = sor.u32 %s50, %s51
      %s53 = ssub.s32 %s26, %s37
      %s54 = sor.u32 %s52, %s53
      %p55 = scmp.eq.s32.totalorder %s54, 0
      %s57 = sadd.s32 %s56, 1
      %s58 = scalar_select %p55, %s56, %s57
      %p61 = pneg %p55
      %p62 = scmp.eq.s32.totalorder %s16, 1
      %p63 = por %p61, %p62
      %p64 = scmp.ne.s32.totalorder %s56, %s59
      %p65 = scmp.eq.s32.totalorder %s16, 0
      %p66 = por %p64, %p65
      %p67 = scmp.ne.s32.totalorder %s56, %s59
      %p68 = scmp.eq.s32.totalorder %s21, 1
      %p69 = por %p67, %p68
      %p70 = scmp.ne.s32.totalorder %s59, %s60
      %p71 = scmp.eq.s32.totalorder %s21, 0
      %p72 = por %p70, %p71
      %p73 = scmp.ne.s32.totalorder %s59, %s60
      %p74 = scmp.eq.s32.totalorder %s22, 1
      %p75 = por %p73, %p74
      %p77 = scmp.ne.s32.totalorder %s60, %s76
      %p78 = scmp.eq.s32.totalorder %s22, 0
      %p79 = por %p77, %p78
      %s80 = ssub.s32 %s26, %s37
      %s81 = ssub.s32 %s25, %s41
      %s82 = sor.u32 %s80, %s81
      %p83 = scmp.eq.s32.totalorder %s82, 0
      %s85 = sadd.s32 %s84, 1
      %s86 = scalar_select %p83, %s84, %s85
      %p89 = pneg %p83
      %p90 = scmp.eq.s32.totalorder %s16, 1
      %p91 = por %p89, %p90
      %p92 = scmp.ne.s32.totalorder %s84, %s87
      %p93 = scmp.eq.s32.totalorder %s16, 0
      %p94 = por %p92, %p93
      %p95 = scmp.ne.s32.totalorder %s84, %s87
      %p96 = scmp.eq.s32.totalorder %s21, 1
      %p97 = por %p95, %p96
      %p98 = scmp.ne.s32.totalorder %s87, %s88
      %p99 = scmp.eq.s32.totalorder %s21, 0
      %p100 = por %p98, %p99
      %p101 = scmp.ne.s32.totalorder %s87, %s88
      %p102 = scmp.eq.s32.totalorder %s22, 1
      %p103 = por %p101, %p102
      %p105 = scmp.ne.s32.totalorder %s88, %s104
      %p106 = scmp.eq.s32.totalorder %s22, 0
      %p107 = por %p105, %p106
      %s108 = ssub.s32 %s25, %s41
      %p109 = scmp.eq.s32.totalorder %s108, 0
      %s111 = sadd.s32 %s110, 1
      %s112 = scalar_select %p109, %s110, %s111
      %p115 = pneg %p109
      %p116 = scmp.eq.s32.totalorder %s16, 1
      %p117 = por %p115, %p116
      %p118 = scmp.ne.s32.totalorder %s110, %s113
      %p119 = scmp.eq.s32.totalorder %s16, 0
      %p120 = por %p118, %p119
      %p121 = scmp.ne.s32.totalorder %s110, %s113
      %p122 = scmp.eq.s32.totalorder %s21, 1
      %p123 = por %p121, %p122
      %p124 = scmp.ne.s32.totalorder %s113, %s114
      %p125 = scmp.eq.s32.totalorder %s21, 0
      %p126 = por %p124, %p125
      %p127 = scmp.ne.s32.totalorder %s113, %s114
      %p128 = scmp.eq.s32.totalorder %s22, 1
      %p129 = por %p127, %p128
      %p131 = scmp.ne.s32.totalorder %s114, %s130
      %p132 = scmp.eq.s32.totalorder %s22, 0
      %p133 = por %p131, %p132
      %s134 = ssub.s32 %s23, %s49
      %s135 = ssub.s32 %s24, %s45
      %s136 = sor.u32 %s134, %s135
      %s137 = ssub.s32 %s25, %s41
      %s138 = sor.u32 %s136, %s137
      %p139 = scmp.eq.s32.totalorder %s138, 0
      %s141 = sadd.s32 %s140, 1
      %s142 = scalar_select %p139, %s140, %s141
      %p145 = pneg %p139
      %p146 = scmp.eq.s32.totalorder %s16, 1
      %p147 = por %p145, %p146
      %p148 = scmp.ne.s32.totalorder %s140, %s143
      %p149 = scmp.eq.s32.totalorder %s16, 0
      %p150 = por %p148, %p149
      %p151 = scmp.ne.s32.totalorder %s140, %s143
      %p152 = scmp.eq.s32.totalorder %s21, 1
      %p153 = por %p151, %p152
      %p154 = scmp.ne.s32.totalorder %s143, %s144
      %p155 = scmp.eq.s32.totalorder %s21, 0
      %p156 = por %p154, %p155
      %p157 = scmp.ne.s32.totalorder %s143, %s144
      %p158 = scmp.eq.s32.totalorder %s22, 1
      %p159 = por %p157, %p158
      %p161 = scmp.ne.s32.totalorder %s144, %s160
      %p162 = scmp.eq.s32.totalorder %s22, 0
      %p163 = por %p161, %p162
      %p164 = scmp.le.s32.totalorder 1, %s16
      %p165 = scmp.lt.s32.totalorder %s16, 3
      %p166 = pnand %p164, %p165
      %p167 = pneg %p166
      // Predicated region
      $region9: #{tpu_custom_call.1} parent=5 // pred_check
        _
      $region10: #{tpu_custom_call.1} parent=5 // pred_check_branch
        %169 = sbr.rel (%p166) target = $region12
      $region11: #{tpu_custom_call.1} parent=5 // pred_region
        %s170 = ssub.s32 %s16, 1
        // Predicated region
        $region13: #{tpu_custom_call.1} parent=11 // pred_check
          %p171 = pneg %p100
        $region14: #{tpu_custom_call.1} parent=11 // pred_check_branch
          %173 = sbr.rel (%p171) target = $region16
        $region15: #{tpu_custom_call.1} parent=11 // pred_region
          %s174 = smul.u32 4, %s30
          %176 = vsyncadd [#allocation7], 0
          %s177 = sadd.s32 %s29, %s174
          %s178 = smul.addr %s177, 8
          %s179 = scalar_lea.hbm %s1, %s178
          %s180 = sshll.u32 %s179, 4
          %s181 = int_to_ptr.hbm [resolvable:$true] %s180
          %s182 = sshll.u32 [#allocation6], 4
          %s183 = int_to_ptr.vmem [resolvable:$true] %s182
          %188 = dma.hbm_to_vmem [thread:$0]  %s181, 512, %s183, [#allocation7], 128, 128, 8
        $region16: #{tpu_custom_call.1} parent=11 // pred_fallthru
          _
        // Predicated region
        $region17: #{tpu_custom_call.1} parent=11 // pred_check
          %p189 = pneg %p126
        $region18: #{tpu_custom_call.1} parent=11 // pred_check_branch
          %191 = sbr.rel (%p189) target = $region20
        $region19: #{tpu_custom_call.1} parent=11 // pred_region
          %p192 = scmp.lt.s32.totalorder %s29, 0
          %s193 = scalar_select %p192, %s29, 0
          %s194 = scalar_lea.vmem %s2, %s193
        $region20: #{tpu_custom_call.1} parent=11 // pred_fallthru
          _
      $region12: #{tpu_custom_call.1} parent=5 // pred_fallthru
        _
      %p195 = scmp.lt.s32.totalorder %s16, 2
      // Predicated region
      $region21: #{tpu_custom_call.1} parent=5 // pred_check
        %p196 = pneg %p195
      $region22: #{tpu_custom_call.1} parent=5 // pred_check_branch
        %198 = sbr.rel (%p196) target = $region24
      $region23: #{tpu_custom_call.1} parent=5 // pred_region
        // Predicated region
        $region25: #{tpu_custom_call.1} parent=23 // pred_check
          %p199 = pneg %p66
        $region26: #{tpu_custom_call.1} parent=23 // pred_check_branch
          %201 = sbr.rel (%p199) target = $region28
        $region27: #{tpu_custom_call.1} parent=23 // pred_region
          %s202 = sand.u32 %s56, 1
          %s203 = scalar_lea.sflag [#allocation4], %s202
          %s204 = sand.u32 %s56, 1
          %s205 = smul.addr %s204, 8
          %s206 = scalar_lea.vmem [#allocation3], %s205
          %208 = vsyncadd %s203, 0
          %s209 = sadd.s32 %s26, %s24
          %s210 = sadd.s32 %s209, %s23
          %s211 = smul.addr %s210, 8
          %s212 = scalar_lea.hbm %s0, %s211
          %s214 = sshll.u32 %s212, 4
          %s215 = int_to_ptr.hbm [resolvable:$true] %s214
          %s216 = sshll.u32 %s206, 4
          %s217 = int_to_ptr.vmem [resolvable:$true] %s216
          %219 = dma.hbm_to_vmem [thread:$0]  %s215, 128, %s217, %s203
        $region28: #{tpu_custom_call.1} parent=23 // pred_fallthru
          _
      $region24: #{tpu_custom_call.1} parent=5 // pred_fallthru
        _
      %p220 = scmp.le.s32.totalorder 1, %s16
      %p221 = scmp.lt.s32.totalorder %s16, 3
      %p222 = pnand %p220, %p221
      %p223 = pneg %p222
      // Predicated region
      $region29: #{tpu_custom_call.1} parent=5 // pred_check
        _
      $region30: #{tpu_custom_call.1} parent=5 // pred_check_branch
        %225 = sbr.rel (%p222) target = $region32
      $region31: #{tpu_custom_call.1} parent=5 // pred_region
        %s226 = ssub.s32 %s16, 1
        %s227 = sand.u32 %s59, 1
        %s228 = scalar_lea.sflag [#allocation4], %s227
        %s229 = sand.u32 %s59, 1
        %s230 = smul.addr %s229, 8
        %s231 = scalar_lea.vmem [#allocation3], %s230
        // Predicated region
        $region33: #{tpu_custom_call.1} parent=31 // pred_check
          %p232 = pneg %p72
        $region34: #{tpu_custom_call.1} parent=31 // pred_check_branch
          %234 = sbr.rel (%p232) target = $region36
        $region35: #{tpu_custom_call.1} parent=31 // pred_region
          %236 = dma.done %s228, 128
        $region36: #{tpu_custom_call.1} parent=31 // pred_fallthru
          _
        // Predicated region
        $region37: #{tpu_custom_call.1} parent=31 // pred_check
          %p237 = pneg %p100
        $region38: #{tpu_custom_call.1} parent=31 // pred_check_branch
          %239 = sbr.rel (%p237) target = $region40
        $region39: #{tpu_custom_call.1} parent=31 // pred_region
          %241 = dma.done [#allocation7], 512
        $region40: #{tpu_custom_call.1} parent=31 // pred_fallthru
          _
        %s242 = sand.u32 %s59, 1
        %s243 = scalar_lea.sflag [#allocation4], %s242
        %s244 = sand.u32 %s59, 1
        %s245 = smul.addr %s244, 8
        %s246 = scalar_lea.vmem [#allocation3], %s245
        %p247 = pneg %p72
        %p248 = pneg %p69
        %p249 = pneg %p100
        %p250 = pneg %p97
        %p251 = scmp.lt.s32.totalorder %s29, 0
        %s252 = scalar_select %p251, %s29, 0
        %s253 = scalar_lea.vmem %s2, %s252
        %p254 = pneg %p126
        %p255 = pneg %p123
        %p256 = pneg %p156
        %p257 = pneg %p153
        %s258 = sand.u32 %s143, 1
        %s259 = scalar_lea.sflag [#allocation5], %s258
        %s260 = sand.u32 %s143, 1
        %s261 = smul.addr %s260, 8
        %s262 = scalar_lea.vmem [#allocation8], %s261
        %s263 = smul.u32 4, %s30
        %p264 = scmp.lt.s32.totalorder %s29, 0
        %s265 = scalar_select %p264, %s29, 0
        %s266 = scalar_lea.vmem %s2, %s265
        %p268 = scmp.eq.s32.totalorder %s30, 0
        // Predicated region
        $region41: #{tpu_custom_call.1} parent=31 // pred_check
          %p269 = pneg %p268
        $region42: #{tpu_custom_call.1} parent=31 // pred_check_branch
          %271 = sbr.rel (%p269) target = $region44
        $region43: #{tpu_custom_call.1} parent=31 // pred_region
          %vm272 = vcmask 785408
          %273 = vst.msk [vmem:[#allocation2] sm:$0xff] %vm272, 0.0
        $region44: #{tpu_custom_call.1} parent=31 // pred_fallthru
          _
        %v274 = vld [vmem:[#allocation2] sm:$0xff]
        %v275 = vld [vmem:[%s231] sm:$0xff]
        %v276 = vpack.c.bf16 %v275, %v275
        %v277 = vld [vmem:[#allocation6] sm:$0xff]
        %v278 = vld [vmem:[#allocation6 + $0x8] sm:$0xff]
        %v279 = vld [vmem:[#allocation6 + $0x10] sm:$0xff]
        %v280 = vld [vmem:[#allocation6 + $0x18] sm:$0xff]
        %v281 = vpack.c.bf16 %v278, %v277
        %v282 = vpack.c.bf16 %v280, %v279
        %vm283 = vcmask 261120
        %v285 = vsel %vm283, %v276, 0
        %287 = vmatpush.bf16.msra.mxu0 0
        %288 = vmatpush.bf16.msra.mxu0 0
        %289 = vmatpush.bf16.msra.mxu0 0
        %290 = vmatpush.bf16.msra.mxu0 0
        %291 = vmatpush.bf16.msra.mxu0 0
        %292 = vmatpush.bf16.msra.mxu0 0
        %293 = vmatpush.bf16.msra.mxu0 %v282
        %294 = vmatpush.bf16.msra.mxu0 %v281
        %295 = vmatmul.bf16.gmra.mxu0 %v285
        %v296 = vpop.f32.mrf.mxu0
        %v297 = vadd.f32 0.0, %v296
        %v298 = vpop.f32.mrf.mxu0
        %299 = vdwg.mxu0
        %v300 = vadd.f32 %v274, %v297
        %vm301 = vcmask 785408
        %302 = vst.msk [vmem:[#allocation2] sm:$0xff] %vm301, %v300
        // Predicated region
        $region45: #{tpu_custom_call.1} parent=31 // pred_check
          %p303 = pneg %p268
        $region46: #{tpu_custom_call.1} parent=31 // pred_check_branch
          %305 = sbr.rel (%p303) target = $region48
        $region47: #{tpu_custom_call.1} parent=31 // pred_region
          %v306 = vld [vmem:[#allocation2] sm:$0xff]
          %v307 = vld [vmem:[%s266] sm:$0x1]
          %v309 = vperm.slane %v307, 0
          %v311 = vadd.f32 %v306, %v309
          %312 = vst.msk [vmem:[%s262] sm:$0xff] %vm301, %v311
        $region48: #{tpu_custom_call.1} parent=31 // pred_fallthru
          _
        %s313 = sand.u32 %s143, 1
        %s314 = scalar_lea.sflag [#allocation5], %s313
        %s315 = sand.u32 %s143, 1
        %s316 = smul.addr %s315, 8
        %s317 = scalar_lea.vmem [#allocation8], %s316
        // Predicated region
        $region49: #{tpu_custom_call.1} parent=31 // pred_check
          %p318 = pneg %p153
        $region50: #{tpu_custom_call.1} parent=31 // pred_check_branch
          %320 = sbr.rel (%p318) target = $region52
        $region51: #{tpu_custom_call.1} parent=31 // pred_region
          %322 = vsyncadd %s314, 0
          %s323 = sadd.s32 %s29, %s28
          %s324 = sadd.s32 %s323, %s27
          %s325 = smul.addr %s324, 8
          %s326 = scalar_lea.hbm %s3, %s325
          %s328 = sshll.u32 %s317, 4
          %s329 = int_to_ptr.vmem [resolvable:$true] %s328
          %s330 = sshll.u32 %s326, 4
          %s331 = int_to_ptr.hbm [resolvable:$true] %s330
          %333 = dma.vmem_to_hbm [thread:$0]  %s329, 128, %s331, %s314
        $region52: #{tpu_custom_call.1} parent=31 // pred_fallthru
          _
      $region32: #{tpu_custom_call.1} parent=5 // pred_fallthru
        _
      %p334 = scmp.le.s32.totalorder 2, %s16
      // Predicated region
      $region53: #{tpu_custom_call.1} parent=5 // pred_check
        %p335 = pneg %p334
      $region54: #{tpu_custom_call.1} parent=5 // pred_check_branch
        %337 = sbr.rel (%p335) target = $region56
      $region55: #{tpu_custom_call.1} parent=5 // pred_region
        %s338 = ssub.s32 %s16, 2
        // Predicated region
        $region57: #{tpu_custom_call.1} parent=55 // pred_check
          %p339 = pneg %p159
        $region58: #{tpu_custom_call.1} parent=55 // pred_check_branch
          %341 = sbr.rel (%p339) target = $region60
        $region59: #{tpu_custom_call.1} parent=55 // pred_region
          %s342 = sand.u32 %s144, 1
          %s343 = scalar_lea.sflag [#allocation5], %s342
          %s344 = sand.u32 %s144, 1
          %s345 = smul.addr %s344, 8
          %s346 = scalar_lea.vmem [#allocation8], %s345
          %348 = dma.done %s343, 128
        $region60: #{tpu_custom_call.1} parent=55 // pred_fallthru
          _
      $region56: #{tpu_custom_call.1} parent=5 // pred_fallthru
        _
    $region6: #{tpu_custom_call.1} parent=1 // loop_footer
      %s20 = sadd.s32 1, %s16
    $region7: #{tpu_custom_call.1} parent=1 // loop_footer_branch
      %15 = sbr.rel target = $region3
    $region8: #{tpu_custom_call.1} parent=1 // loop_exit
      _
    %349 = vsyncpa [#allocation4], 1
    %s350 = scalar_lea.sflag [#allocation4], 1
    %351 = vsyncpa %s350, 1
    %352 = vsyncpa [#allocation7], 1
    %353 = vsyncpa [#allocation5], 1
    %s354 = scalar_lea.sflag [#allocation5], 1
    %355 = vsyncpa %s354, 1

</llo_original>
